<compile_context>
chip_gen: v7x
topology: tpu7x:2x2x1
jax: 0.10.0
libtpu: 0.0.40
codegen_flags: <defaults>
</compile_context>

<pallas_src>
import jax
import jax.numpy as jnp
from jax import lax
from jax.experimental import pallas as pl
from jax.experimental.pallas import tpu as pltpu

EPS = 1e-5
NPLANES = 18  # 3 input channels x 2 row parities x 3 column families


def _choose_band(Ho, Wo, target_lanes):
    """Output rows per band RB (divides Ho).  Pass-2 output blocks are RB*Wo
    lanes, which must be a multiple of 128 unless the whole image is one band."""
    valid = []
    for rb in range(1, Ho + 1):
        if Ho % rb:
            continue
        if Ho // rb > 1 and (rb * Wo) % 128 != 0:
            continue
        valid.append(rb)
    fits = [rb for rb in valid if rb * Wo <= target_lanes]
    rb = max(fits) if fits else min(valid)
    return rb, Ho // rb


def _make_kernels(Wo, T):
    """Kernels for one row-band: T = RB*Wo output lanes, input block (18, T+Wo)."""

    def conv_pool(x_ref, w0_ref, w1_ref):
        # Plane rows ordered c = (ph*3 + f)*3 + ci.  kh in {0,1} taps read the
        # block at lane offset 0; the kh=2 taps are the ph=0 planes one
        # plane-row lower, i.e. lane offset +Wo.
        x0 = x_ref[:, 0:T]                       # (18, T)
        x1 = x_ref[0:9, Wo:Wo + T]               # (9, T)  ph=0 planes, next row
        conv = (jnp.dot(w0_ref[...], x0, preferred_element_type=jnp.float32) +
                jnp.dot(w1_ref[...], x1, preferred_element_type=jnp.float32))  # (13, T)
        # 2x2/stride-2 max pool taps (single f32 cast per slab, max in f32):
        #   (ph=1,f=1), (ph=1,f=2) at offset 0 ; (ph=0,f=1), (ph=0,f=2) at +Wo.
        p00 = x_ref[12:15, 0:T].astype(jnp.float32)
        p01 = x_ref[15:18, 0:T].astype(jnp.float32)
        p10 = x_ref[3:6, Wo:Wo + T].astype(jnp.float32)
        p11 = x_ref[6:9, Wo:Wo + T].astype(jnp.float32)
        pool = jnp.maximum(jnp.maximum(p00, p01), jnp.maximum(p10, p11))        # (3, T)
        return jnp.concatenate([conv, pool], axis=0)                            # (16, T)

    def stats_kernel(x_ref, w0_ref, w1_ref, stats_ref):
        feat = conv_pool(x_ref, w0_ref, w1_ref)
        s = jnp.sum(feat, axis=1, keepdims=True)             # (16, 1)
        q = jnp.sum(feat * feat, axis=1, keepdims=True)      # (16, 1)
        # One lane-dense (16, 256) store per step: [sum | sum-of-squares].
        stats_ref[...] = jnp.concatenate(
            [jnp.broadcast_to(s, (16, 128)), jnp.broadcast_to(q, (16, 128))],
            axis=1)

    def norm_kernel(alpha_ref, x_ref, w0_ref, w1_ref, scale_ref, shift_ref, out_ref):
        alpha = alpha_ref[0]                                  # SMEM scalar
        feat = conv_pool(x_ref, w0_ref, w1_ref)
        y = feat * scale_ref[...] + shift_ref[...]
        out_ref[...] = jnp.where(y >= 0, y, alpha * y)        # single full (16, T) store

    return stats_kernel, norm_kernel


def initial_block(x, w, gamma, beta, alpha, *, target_lanes=16384,
                  vmem_limit_bytes=48 * 1024 * 1024):
    """x: (N, 3, H, W) float32 NCHW.  Returns (N, 16, H//2, W//2) float32.

    target_lanes: output lanes per grid step (~16K fits comfortably in scoped
    VMEM on v5e/v6e/v7x; raise to 32K-64K on v7x to better feed its HBM)."""
    N, C, H, W = x.shape
    assert C == 3 and H % 2 == 0 and W % 2 == 0
    # TODO(synk): odd H/W (PyTorch reflect-pad of the pooled branch) not supported.
    Ho, Wo = H // 2, W // 2
    RB, J = _choose_band(Ho, Wo, target_lanes)
    T = RB * Wo                      # output lanes per band
    Lin = (RB + 1) * Wo              # input lanes per band (incl. halo plane-row)

    # --- prep: 18 bf16 planes (the only HBM materialization; no im2col) ------
    xp = jnp.pad(x, ((0, 0), (0, 0), (1, 1), (1, 1))).astype(jnp.bfloat16)
    slabs = [xp[:, :, ph:ph + 2 * Ho + 1:2, f:f + 2 * Wo - 1:2]   # (N, 3, Ho+1, Wo)
             for ph in range(2) for f in range(3)]
    planes = jnp.stack(slabs, axis=1).reshape(N, NPLANES, Ho + 1, Wo)
    # Row-bands of RB output rows; consecutive bands share one plane-row, which
    # is duplicated so each band is a full (18, (RB+1)*Wo) slab (blocks = full dims).
    xb = jnp.stack([planes[:, :, j * RB:j * RB + RB + 1, :] for j in range(J)],
                   axis=1).reshape(N, J, NPLANES, Lin)

    # Conv weights regrouped to match the plane ordering (OIHW -> (13,18)/(13,9)).
    wf = w.astype(jnp.float32)
    w0 = jnp.transpose(wf[:, :, 0:2, :], (0, 2, 3, 1)).reshape(13, 18).astype(jnp.bfloat16)
    w1 = jnp.transpose(wf[:, :, 2, :], (0, 2, 1)).reshape(13, 9).astype(jnp.bfloat16)

    x_spec = pl.BlockSpec((None, None, NPLANES, Lin), lambda n, j: (n, j, 0, 0))
    w0_spec = pl.BlockSpec((13, 18), lambda n, j: (0, 0))
    w1_spec = pl.BlockSpec((13, 9), lambda n, j: (0, 0))
    cparams = pltpu.CompilerParams(
        dimension_semantics=("parallel", "parallel"),
        vmem_limit_bytes=vmem_limit_bytes)

    stats_kernel, norm_kernel = _make_kernels(Wo, T)

    # --- pass 1: per-band per-channel sum / sum-of-squares (lane-dense) ------
    stats = pl.pallas_call(
        stats_kernel,
        grid_spec=pltpu.PrefetchScalarGridSpec(
            num_scalar_prefetch=0,
            grid=(N, J),
            in_specs=[x_spec, w0_spec, w1_spec],
            out_specs=pl.BlockSpec((None, None, 16, 256), lambda n, j: (n, j, 0, 0))),
        out_shape=jax.ShapeDtypeStruct((N, J, 16, 256), jnp.float32),
        compiler_params=cparams,
    )(xb, w0, w1)

    # --- fold BN (training-mode batch stats, biased var) into scale/shift ----
    cnt = jnp.float32(N * Ho * Wo)
    tot = jnp.sum(stats, axis=(0, 1))                         # (16, 256)
    mean = tot[:, 0:1] / cnt
    var = tot[:, 128:129] / cnt - mean * mean
    # TODO(synk): E[x^2]-E[x]^2 in f32 can cancel for channels with |mean|>>std.
    scale = gamma.reshape(16, 1).astype(jnp.float32) * lax.rsqrt(var + EPS)
    shift = beta.reshape(16, 1).astype(jnp.float32) - mean * scale
    alpha_s = jnp.asarray(alpha, jnp.float32).reshape(1)

    # --- pass 2: conv + pool + affine BN + PReLU, one (16, T) store per band --
    out = pl.pallas_call(
        norm_kernel,
        grid_spec=pltpu.PrefetchScalarGridSpec(
            num_scalar_prefetch=0,
            grid=(N, J),
            in_specs=[
                pl.BlockSpec(memory_space=pltpu.MemorySpace.SMEM),   # alpha
                x_spec, w0_spec, w1_spec,
                pl.BlockSpec((16, 1), lambda n, j: (0, 0)),          # scale
                pl.BlockSpec((16, 1), lambda n, j: (0, 0)),          # shift
            ],
            out_specs=pl.BlockSpec((None, 16, T), lambda n, j: (n, 0, j))),
        out_shape=jax.ShapeDtypeStruct((N, 16, Ho * Wo), jnp.float32),
        compiler_params=cparams,
    )(alpha_s, xb, w0, w1, scale, shift)

    # Lanes within an image are row-major (ho, wo): NCHW is a pure reshape.
    return out.reshape(N, 16, Ho, Wo)


def initial_block_reference(x, w, gamma, beta, alpha):
    """Pure-JAX f32 reference mirroring the PyTorch forward."""
    main = lax.conv_general_dilated(
        x, w, window_strides=(2, 2), padding=((1, 1), (1, 1)),
        dimension_numbers=("NCHW", "OIHW", "NCHW"),
        precision=lax.Precision.HIGHEST)
    ext = lax.reduce_window(x, -jnp.inf, lax.max,
                            (1, 1, 2, 2), (1, 1, 2, 2), "VALID")
    out = jnp.concatenate([main, ext], axis=1)
    mean = out.mean(axis=(0, 2, 3), keepdims=True)
    var = ((out - mean) ** 2).mean(axis=(0, 2, 3), keepdims=True)
    bn = (out - mean) / jnp.sqrt(var + EPS)
    bn = bn * gamma.reshape(1, 16, 1, 1) + beta.reshape(1, 16, 1, 1)
    return jnp.where(bn >= 0, bn, alpha * bn)


if __name__ == "__main__":
    key = jax.random.PRNGKey(0)
    kx, kw_key = jax.random.split(key)

    # Small shapes consistent with the module: NCHW, 3 input channels.
    N, C, H, W = 2, 3, 16, 16
    x = jax.random.normal(kx, (N, C, H, W), jnp.float32)

    # Deterministic parameters (PyTorch defaults for BN / PReLU at init).
    w = jax.random.normal(kw_key, (13, 3, 3, 3), jnp.float32) * 0.1  # conv, no bias
    gamma = jnp.ones((16,), jnp.float32)
    beta = jnp.zeros((16,), jnp.float32)
    alpha = jnp.float32(0.25)

    out = jax.block_until_ready(initial_block(x, w, gamma, beta, alpha))
    ref = jax.block_until_ready(initial_block_reference(x, w, gamma, beta, alpha))

    assert out.shape == (N, 16, H // 2, W // 2), out.shape
    # Kernel uses bf16 conv/pool operands (f32 accumulation) vs a full-f32
    # HIGHEST-precision reference: errors are O(bf16 ulp) post-BN, tolerance 2e-2.
    max_err = float(jnp.abs(out - ref).max())
    assert jnp.allclose(out, ref, atol=2e-2, rtol=2e-2), max_err
    print("KERNEL_OK")
</pallas_src>

<mosaic_0001>
module attributes {stable_mosaic.version = 11 : i64} {
  func.func @stats_kernel(%arg0: i32, %arg1: i32, %arg2: memref<1x1x18x72xbf16, #tpu.memory_space<vmem>>, %arg3: memref<13x18xbf16, #tpu.memory_space<vmem>>, %arg4: memref<13x9xbf16, #tpu.memory_space<vmem>>, %arg5: memref<1x1x16x256xf32, #tpu.memory_space<vmem>>) attributes {dimension_semantics = [#tpu.dimension_semantics<parallel>, #tpu.dimension_semantics<parallel>], iteration_bounds = array<i64: 2, 1>, scalar_prefetch = 0 : i64, scratch_operands = 0 : i64, tpu.core_type = #tpu.core_type<tc>, window_params = [{transform_indices = @transform_0, window_bounds = array<i64: 1, 1, 18, 72>}, {pipeline_mode = #tpu.pipeline_mode<synchronous>, transform_indices = @transform_1, window_bounds = array<i64: 13, 18>}, {pipeline_mode = #tpu.pipeline_mode<synchronous>, transform_indices = @transform_2, window_bounds = array<i64: 13, 9>}, {transform_indices = @transform_3, window_bounds = array<i64: 1, 1, 16, 256>}]} {
    %c0 = arith.constant 0 : index
    %c0_0 = arith.constant 0 : index
    %c0_1 = arith.constant 0 : index
    %c0_2 = arith.constant 0 : index
    %0 = vector.load %arg2[%c0, %c0_0, %c0_1, %c0_2] : memref<1x1x18x72xbf16, #tpu.memory_space<vmem>>, vector<1x1x18x64xbf16>
    %1 = vector.shape_cast %0 : vector<1x1x18x64xbf16> to vector<18x64xbf16>
    %c0_3 = arith.constant 0 : index
    %c0_4 = arith.constant 0 : index
    %c0_5 = arith.constant 0 : index
    %c8 = arith.constant 8 : index
    %2 = vector.load %arg2[%c0_3, %c0_4, %c0_5, %c8] : memref<1x1x18x72xbf16, #tpu.memory_space<vmem>>, vector<1x1x9x64xbf16>
    %3 = vector.shape_cast %2 : vector<1x1x9x64xbf16> to vector<9x64xbf16>
    %c0_6 = arith.constant 0 : index
    %c0_7 = arith.constant 0 : index
    %4 = vector.load %arg3[%c0_6, %c0_7] : memref<13x18xbf16, #tpu.memory_space<vmem>>, vector<13x18xbf16>
    %cst = arith.constant dense<0.000000e+00> : vector<13x64xf32>
    %5 = tpu.matmul %4, %1, %cst {dimension_numbers = #tpu.dot_dimension_numbers<[1], [0], [0], [1], [0, 0, 1, 1], [], []>} : vector<13x18xbf16>, vector<18x64xbf16>, vector<13x64xf32> -> vector<13x64xf32>
    %c0_8 = arith.constant 0 : index
    %c0_9 = arith.constant 0 : index
    %6 = vector.load %arg4[%c0_8, %c0_9] : memref<13x9xbf16, #tpu.memory_space<vmem>>, vector<13x9xbf16>
    %cst_10 = arith.constant dense<0.000000e+00> : vector<13x64xf32>
    %7 = tpu.matmul %6, %3, %cst_10 {dimension_numbers = #tpu.dot_dimension_numbers<[1], [0], [0], [1], [0, 0, 1, 1], [], []>} : vector<13x9xbf16>, vector<9x64xbf16>, vector<13x64xf32> -> vector<13x64xf32>
    %8 = arith.addf %5, %7 : vector<13x64xf32>
    %c0_11 = arith.constant 0 : index
    %c0_12 = arith.constant 0 : index
    %c12 = arith.constant 12 : index
    %c0_13 = arith.constant 0 : index
    %9 = vector.load %arg2[%c0_11, %c0_12, %c12, %c0_13] : memref<1x1x18x72xbf16, #tpu.memory_space<vmem>>, vector<1x1x3x64xbf16>
    %10 = vector.shape_cast %9 : vector<1x1x3x64xbf16> to vector<3x64xbf16>
    %11 = arith.extf %10 : vector<3x64xbf16> to vector<3x64xf32>
    %c0_14 = arith.constant 0 : index
    %c0_15 = arith.constant 0 : index
    %c15 = arith.constant 15 : index
    %c0_16 = arith.constant 0 : index
    %12 = vector.load %arg2[%c0_14, %c0_15, %c15, %c0_16] : memref<1x1x18x72xbf16, #tpu.memory_space<vmem>>, vector<1x1x3x64xbf16>
    %13 = vector.shape_cast %12 : vector<1x1x3x64xbf16> to vector<3x64xbf16>
    %14 = arith.extf %13 : vector<3x64xbf16> to vector<3x64xf32>
    %c0_17 = arith.constant 0 : index
    %c0_18 = arith.constant 0 : index
    %c3 = arith.constant 3 : index
    %c8_19 = arith.constant 8 : index
    %15 = vector.load %arg2[%c0_17, %c0_18, %c3, %c8_19] : memref<1x1x18x72xbf16, #tpu.memory_space<vmem>>, vector<1x1x3x64xbf16>
    %16 = vector.shape_cast %15 : vector<1x1x3x64xbf16> to vector<3x64xbf16>
    %17 = arith.extf %16 : vector<3x64xbf16> to vector<3x64xf32>
    %c0_20 = arith.constant 0 : index
    %c0_21 = arith.constant 0 : index
    %c6 = arith.constant 6 : index
    %c8_22 = arith.constant 8 : index
    %18 = vector.load %arg2[%c0_20, %c0_21, %c6, %c8_22] : memref<1x1x18x72xbf16, #tpu.memory_space<vmem>>, vector<1x1x3x64xbf16>
    %19 = vector.shape_cast %18 : vector<1x1x3x64xbf16> to vector<3x64xbf16>
    %20 = arith.extf %19 : vector<3x64xbf16> to vector<3x64xf32>
    %21 = arith.maximumf %11, %14 : vector<3x64xf32>
    %22 = arith.maximumf %17, %20 : vector<3x64xf32>
    %23 = arith.maximumf %21, %22 : vector<3x64xf32>
    %24 = tpu.concatenate %8, %23 in 0 : vector<13x64xf32>, vector<3x64xf32> -> vector<16x64xf32>
    %cst_23 = arith.constant dense<0.000000e+00> : vector<16xf32>
    %25 = vector.multi_reduction <add>, %24, %cst_23 [1] : vector<16x64xf32> to vector<16xf32>
    %26 = vector.shape_cast %25 : vector<16xf32> to vector<16x1xf32>
    %27 = arith.mulf %24, %24 : vector<16x64xf32>
    %cst_24 = arith.constant dense<0.000000e+00> : vector<16xf32>
    %28 = vector.multi_reduction <add>, %27, %cst_24 [1] : vector<16x64xf32> to vector<16xf32>
    %29 = vector.shape_cast %28 : vector<16xf32> to vector<16x1xf32>
    %30 = vector.shape_cast %26 : vector<16x1xf32> to vector<16x1xf32>
    %31 = vector.broadcast %30 : vector<16x1xf32> to vector<16x128xf32>
    %32 = vector.shape_cast %29 : vector<16x1xf32> to vector<16x1xf32>
    %33 = vector.broadcast %32 : vector<16x1xf32> to vector<16x128xf32>
    %34 = tpu.concatenate %31, %33 in 1 : vector<16x128xf32>, vector<16x128xf32> -> vector<16x256xf32>
    %c0_25 = arith.constant 0 : index
    %c0_26 = arith.constant 0 : index
    %c0_27 = arith.constant 0 : index
    %c0_28 = arith.constant 0 : index
    %35 = vector.load %arg5[%c0_25, %c0_26, %c0_27, %c0_28] : memref<1x1x16x256xf32, #tpu.memory_space<vmem>>, vector<1x1x16x256xf32>
    %36 = vector.shape_cast %35 : vector<1x1x16x256xf32> to vector<16x256xf32>
    %37 = vector.shape_cast %34 : vector<16x256xf32> to vector<1x1x16x256xf32>
    tpu.vector_store %arg5[%c0_25, %c0_26, %c0_27, %c0_28], %37 {strides = array<i32>} : memref<1x1x16x256xf32, #tpu.memory_space<vmem>>, vector<1x1x16x256xf32>,
    return
  }
  func.func @transform_0(%arg0: i32, %arg1: i32) -> (i32, i32, i32, i32) {
    %c0_i32 = arith.constant 0 : i32
    %c0_i32_0 = arith.constant 0 : i32
    %c0_i32_1 = arith.constant 0 : i32
    return %arg0, %arg1, %c0_i32, %c0_i32_0 : i32, i32, i32, i32
  }
  func.func @transform_1(%arg0: i32, %arg1: i32) -> (i32, i32) {
    %c0_i32 = arith.constant 0 : i32
    %c0_i32_0 = arith.constant 0 : i32
    %c0_i32_1 = arith.constant 0 : i32
    return %c0_i32, %c0_i32_0 : i32, i32
  }
  func.func @transform_2(%arg0: i32, %arg1: i32) -> (i32, i32) {
    %c0_i32 = arith.constant 0 : i32
    %c0_i32_0 = arith.constant 0 : i32
    %c0_i32_1 = arith.constant 0 : i32
    return %c0_i32, %c0_i32_0 : i32, i32
  }
  func.func @transform_3(%arg0: i32, %arg1: i32) -> (i32, i32, i32, i32) {
    %c0_i32 = arith.constant 0 : i32
    %c0_i32_0 = arith.constant 0 : i32
    %c0_i32_1 = arith.constant 0 : i32
    return %arg0, %arg1, %c0_i32, %c0_i32_0 : i32, i32, i32, i32
  }
}

</mosaic_0001>

<llo_original>
// kernel: tpu_custom_call.1
$region0: #{tpu_custom_call.1}
  #allocation0 [shape = 'u32[]', space=smem, size = 0x4, offset = 0x4, fixed_abs, tag = 'smem constant byte address 0x4 - core index']
  #allocation1 [shape = 'u32[144,128]{1,0:T(1,128)}', space=vmem, size = 0x12000, scoped, tag = 'internal scratch']
  %s0 = inlined_call_operand.vmem [shape: bf16[2,1,18,72], index: 0, kind: input, shape index: {}]
  %s1 = inlined_call_operand.vmem [shape: bf16[13,18], index: 1, kind: input, shape index: {}]
  %s2 = inlined_call_operand.vmem [shape: bf16[13,9], index: 2, kind: input, shape index: {}]
  %s3 = inlined_call_operand.hbm [shape: f32[2,1,16,256], index: 3, kind: output, shape index: {}]
  %s4 = sld [smem:[#allocation0]]
  $region45: #{tpu_custom_call.1} parent=0
    _
  %s6 = ssub.s32 1, %s4
  %s7 = scalar_select 0, %s6, %s4
  $region1: #{tpu_custom_call.1} parent=0
    #allocation2 [shape = 'u8[32768]{0}', space=vmem, size = 0x8000, scoped, tag = 'output window, operand 0']
    #allocation3 [shape = 's32[2]{0}', space=sflag, size = 0x8, scoped, tag = 'scoped memory for tpu_custom_call.1']
    %8 = vsyncpa [#allocation3], 0
    %s9 = scalar_lea.sflag [#allocation3], 1
    %10 = vsyncpa %s9, 0
    loop: start=0, step=1, limit=4
    $region2: #{tpu_custom_call.1} parent=1 // loop_pre_header
      _
    $region3: #{tpu_custom_call.1} parent=1 // loop_header
      %s12 = sphi 0, %s16
      %p13 = scmp.ge.s32.totalorder %s12, 4
      %s19 = sphi 0, %s31
      %s20 = sphi 0, %s27
      %s21 = sphi 0, %s19
      %s22 = sphi 0, %s20
      %s23 = sphi 0, %s21
      %s24 = sphi 0, %s22
      %s36 = sphi 0, %s38
      %s39 = sphi 0, %s36
      %s40 = sphi 0, %s39
      %s56 = sphi 0, %s40
      %s60 = sphi 0, %s60
      %s62 = sphi 0, %s60
      %s63 = sphi 0, %s62
      %s77 = sphi 0, %s63
      %s81 = sphi 0, %s81
      %s83 = sphi 0, %s81
      %s84 = sphi 0, %s83
      %s98 = sphi 0, %s84
      %s106 = sphi 0, %s108
      %s109 = sphi 0, %s106
      %s110 = sphi 0, %s109
      %s126 = sphi 0, %s110
    $region4: #{tpu_custom_call.1} parent=1 // loop_header_branch
      %15 = sbr.rel (%p13) target = $region8
    $region5: #{tpu_custom_call.1} parent=1 // loop_body
      %s17 = ssub.s32 %s12, 1
      %s18 = ssub.s32 %s12, 2
      %s25 = sadd.s32 1, %s20
      %p26 = scmp.ge.s32.totalorder %s25, 1
      %s27 = scalar_select %p26, 0, %s25
      %s28 = sadd.s32 1, %s19
      %s29 = scalar_select %p26, %s28, %s19
      %p30 = scmp.ge.s32.totalorder %s29, 2
      %s31 = scalar_select %p30, 0, %s29
      %s32 = ssub.s32 %s19, %s31
      %s33 = ssub.s32 %s20, %s27
      %s34 = sor.u32 %s32, %s33
      %p35 = scmp.eq.s32.totalorder %s34, 0
      %s37 = sadd.s32 %s36, 1
      %s38 = scalar_select %p35, %s36, %s37
      %p41 = pneg %p35
      %p42 = scmp.eq.s32.totalorder %s12, 1
      %p43 = por %p41, %p42
      %p44 = scmp.ne.s32.totalorder %s36, %s39
      %p45 = scmp.eq.s32.totalorder %s12, 0
      %p46 = por %p44, %p45
      %p47 = scmp.ne.s32.totalorder %s36, %s39
      %p48 = scmp.eq.s32.totalorder %s17, 1
      %p49 = por %p47, %p48
      %p50 = scmp.ne.s32.totalorder %s39, %s40
      %p51 = scmp.eq.s32.totalorder %s17, 0
      %p52 = por %p50, %p51
      %p53 = scmp.ne.s32.totalorder %s39, %s40
      %p54 = scmp.eq.s32.totalorder %s18, 1
      %p55 = por %p53, %p54
      %p57 = scmp.ne.s32.totalorder %s40, %s56
      %p58 = scmp.eq.s32.totalorder %s18, 0
      %p59 = por %p57, %p58
      %s61 = sadd.s32 %s60, 1
      %p64 = scmp.eq.s32.totalorder %s12, 1
      %p65 = scmp.ne.s32.totalorder %s60, %s62
      %p66 = scmp.eq.s32.totalorder %s12, 0
      %p67 = por %p65, %p66
      %p68 = scmp.ne.s32.totalorder %s60, %s62
      %p69 = scmp.eq.s32.totalorder %s17, 1
      %p70 = por %p68, %p69
      %p71 = scmp.ne.s32.totalorder %s62, %s63
      %p72 = scmp.eq.s32.totalorder %s17, 0
      %p73 = por %p71, %p72
      %p74 = scmp.ne.s32.totalorder %s62, %s63
      %p75 = scmp.eq.s32.totalorder %s18, 1
      %p76 = por %p74, %p75
      %p78 = scmp.ne.s32.totalorder %s63, %s77
      %p79 = scmp.eq.s32.totalorder %s18, 0
      %p80 = por %p78, %p79
      %s82 = sadd.s32 %s81, 1
      %p85 = scmp.eq.s32.totalorder %s12, 1
      %p86 = scmp.ne.s32.totalorder %s81, %s83
      %p87 = scmp.eq.s32.totalorder %s12, 0
      %p88 = por %p86, %p87
      %p89 = scmp.ne.s32.totalorder %s81, %s83
      %p90 = scmp.eq.s32.totalorder %s17, 1
      %p91 = por %p89, %p90
      %p92 = scmp.ne.s32.totalorder %s83, %s84
      %p93 = scmp.eq.s32.totalorder %s17, 0
      %p94 = por %p92, %p93
      %p95 = scmp.ne.s32.totalorder %s83, %s84
      %p96 = scmp.eq.s32.totalorder %s18, 1
      %p97 = por %p95, %p96
      %p99 = scmp.ne.s32.totalorder %s84, %s98
      %p100 = scmp.eq.s32.totalorder %s18, 0
      %p101 = por %p99, %p100
      %s102 = ssub.s32 %s19, %s31
      %s103 = ssub.s32 %s20, %s27
      %s104 = sor.u32 %s102, %s103
      %p105 = scmp.eq.s32.totalorder %s104, 0
      %s107 = sadd.s32 %s106, 1
      %s108 = scalar_select %p105, %s106, %s107
      %p111 = pneg %p105
      %p112 = scmp.eq.s32.totalorder %s12, 1
      %p113 = por %p111, %p112
      %p114 = scmp.ne.s32.totalorder %s106, %s109
      %p115 = scmp.eq.s32.totalorder %s12, 0
      %p116 = por %p114, %p115
      %p117 = scmp.ne.s32.totalorder %s106, %s109
      %p118 = scmp.eq.s32.totalorder %s17, 1
      %p119 = por %p117, %p118
      %p120 = scmp.ne.s32.totalorder %s109, %s110
      %p121 = scmp.eq.s32.totalorder %s17, 0
      %p122 = por %p120, %p121
      %p123 = scmp.ne.s32.totalorder %s109, %s110
      %p124 = scmp.eq.s32.totalorder %s18, 1
      %p125 = por %p123, %p124
      %p127 = scmp.ne.s32.totalorder %s110, %s126
      %p128 = scmp.eq.s32.totalorder %s18, 0
      %p129 = por %p127, %p128
      %p130 = scmp.le.s32.totalorder 1, %s12
      %p131 = scmp.lt.s32.totalorder %s12, 3
      %p132 = pnand %p130, %p131
      %p133 = pneg %p132
      // Predicated region
      $region9: #{tpu_custom_call.1} parent=5 // pred_check
        _
      $region10: #{tpu_custom_call.1} parent=5 // pred_check_branch
        %135 = sbr.rel (%p132) target = $region12
      $region11: #{tpu_custom_call.1} parent=5 // pred_region
        %s136 = ssub.s32 %s12, 1
        // Predicated region
        $region13: #{tpu_custom_call.1} parent=11 // pred_check
          %p137 = pneg %p73
        $region14: #{tpu_custom_call.1} parent=11 // pred_check_branch
          %139 = sbr.rel (%p137) target = $region16
        $region15: #{tpu_custom_call.1} parent=11 // pred_region
          _
        $region16: #{tpu_custom_call.1} parent=11 // pred_fallthru
          _
        // Predicated region
        $region17: #{tpu_custom_call.1} parent=11 // pred_check
          %p140 = pneg %p94
        $region18: #{tpu_custom_call.1} parent=11 // pred_check_branch
          %142 = sbr.rel (%p140) target = $region20
        $region19: #{tpu_custom_call.1} parent=11 // pred_region
          _
        $region20: #{tpu_custom_call.1} parent=11 // pred_fallthru
          _
      $region12: #{tpu_custom_call.1} parent=5 // pred_fallthru
        _
      %p143 = scmp.lt.s32.totalorder %s12, 2
      // Predicated region
      $region21: #{tpu_custom_call.1} parent=5 // pred_check
        %p144 = pneg %p143
      $region22: #{tpu_custom_call.1} parent=5 // pred_check_branch
        %146 = sbr.rel (%p144) target = $region24
      $region23: #{tpu_custom_call.1} parent=5 // pred_region
        // Predicated region
        $region25: #{tpu_custom_call.1} parent=23 // pred_check
          %p147 = pneg %p46
        $region26: #{tpu_custom_call.1} parent=23 // pred_check_branch
          %149 = sbr.rel (%p147) target = $region28
        $region27: #{tpu_custom_call.1} parent=23 // pred_region
          %p150 = scmp.lt.s32.totalorder %s19, 1
          %s151 = scalar_select %p150, %s19, 1
          %p152 = scmp.lt.s32.totalorder %s20, 0
          %s153 = scalar_select %p152, %s20, 0
          %s154 = smul.addr %s153, 3
          %s155 = smul.addr %s151, 3
          %s156 = sadd.s32 %s154, %s155
          %s157 = smul.addr %s156, 4
          %s158 = scalar_lea.vmem %s0, %s157
        $region28: #{tpu_custom_call.1} parent=23 // pred_fallthru
          _
      $region24: #{tpu_custom_call.1} parent=5 // pred_fallthru
        _
      %p159 = scmp.le.s32.totalorder 1, %s12
      %p160 = scmp.lt.s32.totalorder %s12, 3
      %p161 = pnand %p159, %p160
      %p162 = pneg %p161
      // Predicated region
      $region29: #{tpu_custom_call.1} parent=5 // pred_check
        _
      $region30: #{tpu_custom_call.1} parent=5 // pred_check_branch
        %164 = sbr.rel (%p161) target = $region32
      $region31: #{tpu_custom_call.1} parent=5 // pred_region
        %s165 = ssub.s32 %s12, 1
        %p166 = scmp.lt.s32.totalorder %s21, 1
        %s167 = scalar_select %p166, %s21, 1
        %p168 = scmp.lt.s32.totalorder %s22, 0
        %s169 = scalar_select %p168, %s22, 0
        %s170 = smul.addr %s169, 3
        %s171 = smul.addr %s167, 3
        %s172 = sadd.s32 %s170, %s171
        %s173 = smul.addr %s172, 4
        %s174 = scalar_lea.vmem %s0, %s173
        %p175 = pneg %p52
        %p176 = pneg %p49
        %p177 = pneg %p73
        %p178 = pneg %p70
        %p179 = pneg %p94
        %p180 = pneg %p91
        %p181 = pneg %p122
        %p182 = pneg %p119
        %s183 = sand.u32 %s109, 1
        %s184 = scalar_lea.sflag [#allocation3], %s183
        %s185 = sand.u32 %s109, 1
        %s186 = smul.addr %s185, 32
        %s187 = scalar_lea.vmem [#allocation2], %s186
        %p188 = scmp.lt.s32.totalorder %s21, 1
        %s189 = scalar_select %p188, %s21, 1
        %p190 = scmp.lt.s32.totalorder %s22, 0
        %s191 = scalar_select %p190, %s22, 0
        %s192 = smul.addr %s191, 3
        %s193 = smul.addr %s189, 3
        %s194 = sadd.s32 %s192, %s193
        %s195 = smul.addr %s194, 4
        %s196 = scalar_lea.vmem %s0, %s195
        %v198 = vld [vmem:[%s196] sm:$0xf]
        %v199 = vld [vmem:[%s196 + $0x4] sm:$0xf]
        %v200 = vld [vmem:[%s196 + $0x8] sm:$0x1]
        %v201 = vld [vmem:[%s196 + $0x4] sm:$0x1]
        %v202 = vld [vmem:[%s1] sm:$0xf]
        %v203 = vld [vmem:[%s1 + $0x4] sm:$0x7]
        %v204 = vld [vmem:[%s2] sm:$0xf]
        %v205 = vld [vmem:[%s2 + $0x4] sm:$0x7]
        %v208 = vunpack.c.l.b16 %v204
        %v209 = vunpack.c.l.b16 %v205
        %v210 = vpack.c.b16 %v209, %v208
        %v213 = vunpack.c.l.b16 %v198
        %v214 = vunpack.c.l.b16 %v201
        %v215 = vpack.c.b16 %v214, %v213
        %216 = vrot.lane.b32.xlu0 %v215, 120
        %v217 = vpop.permute.xlu0 %216
        %vm218 = vcmask 72704
        %v220 = vsel %vm218, %v210, 0
        %vm222 = vcmask 1043456
        %vm223 = vcmask 1044480
        %v224 = vsel %vm222, 4294967295, 65535
        %v225 = vsel %vm223, %v224, 0
        %v227 = vand.u32 %v217, %v225
        %229 = vmatprep.subr.bf16.mxu0 0
        %230 = vmatpush1.bf16.msra.mxu0 %v227
        %231 = vmatprep.subr.bf16.mxu0 0
        %232 = vmatpush1.bf16.msra.mxu0 0
        %233 = vmatprep.subr.bf16.mxu0 0
        %234 = vmatpush1.bf16.msra.mxu0 0
        %235 = vmatprep.subr.bf16.mxu0 0
        %236 = vmatpush1.bf16.msra.mxu0 0
        %237 = vmatprep.subr.bf16.mxu0 0
        %238 = vmatpush1.bf16.msra.mxu0 0
        %239 = vmatprep.subr.bf16.mxu0 0
        %240 = vmatpush1.bf16.msra.mxu0 0
        %241 = vmatprep.subr.bf16.mxu0 0
        %242 = vmatpush1.bf16.msra.mxu0 0
        %243 = vmatprep.subr.bf16.mxu0 0
        %244 = vmatpush1.bf16.msra.mxu0 0
        %245 = vmatprep.subr.bf16.mxu0 0
        %246 = vmatpush1.bf16.msra.mxu0 0
        %247 = vmatprep.subr.bf16.mxu0 0
        %248 = vmatpush1.bf16.msra.mxu0 0
        %249 = vmatprep.subr.bf16.mxu0 0
        %250 = vmatpush1.bf16.msra.mxu0 0
        %251 = vmatprep.subr.bf16.mxu0 0
        %252 = vmatpush1.bf16.msra.mxu0 0
        %253 = vmatprep.subr.bf16.mxu0 0
        %254 = vmatpush1.bf16.msra.mxu0 0
        %255 = vmatprep.subr.bf16.mxu0 0
        %256 = vmatpush1.bf16.msra.mxu0 0
        %257 = vmatprep.subr.bf16.mxu0 0
        %258 = vmatpush1.bf16.msra.mxu0 0
        %259 = vmatprep.subr.bf16.mxu0 0
        %260 = vmatpush1.bf16.msra.mxu0 0
        %261 = vmatprep.mubr.bf16.mxu0 0
        %262 = vmatmul.mubr.bf16.gmra.mrb[0].mxu0 %v220
        %v263 = vpop.f32.mrb[0].mxu0
        %v264 = vadd.f32 0.0, %v263
        %v265 = vpop.f32.mrb[0].mxu0
        %v266 = vpop.f32.mrb[0].mxu0
        %v267 = vadd.f32 0.0, %v266
        %v268 = vpop.f32.mrb[0].mxu0
        %269 = vdwg.mxu0
        %v272 = vunpack.c.l.b16 %v202
        %v273 = vunpack.c.l.b16 %v203
        %v274 = vpack.c.b16 %v273, %v272
        %v277 = vunpack.c.l.b16 %v199
        %v278 = vunpack.c.l.b16 %v200
        %v279 = vpack.c.b16 %v277, %v213
        %v280 = vpack.c.b16 %v278, %v278
        %vm282 = vcmask 146432
        %v284 = vsel %vm282, %v274, 0
        %vm286 = vcmask 1040384
        %v288 = vsel %vm286, %v280, 0
        %290 = vmatprep.subr.bf16.mxu0 0
        %291 = vmatpush1.bf16.msra.mxu0 %v279
        %292 = vmatprep.subr.bf16.mxu0 0
        %293 = vmatpush1.bf16.msra.mxu0 %v288
        %294 = vmatprep.subr.bf16.mxu0 0
        %295 = vmatpush1.bf16.msra.mxu0 0
        %296 = vmatprep.subr.bf16.mxu0 0
        %297 = vmatpush1.bf16.msra.mxu0 0
        %298 = vmatprep.subr.bf16.mxu0 0
        %299 = vmatpush1.bf16.msra.mxu0 0
        %300 = vmatprep.subr.bf16.mxu0 0
        %301 = vmatpush1.bf16.msra.mxu0 0
        %302 = vmatprep.subr.bf16.mxu0 0
        %303 = vmatpush1.bf16.msra.mxu0 0
        %304 = vmatprep.subr.bf16.mxu0 0
        %305 = vmatpush1.bf16.msra.mxu0 0
        %306 = vmatprep.subr.bf16.mxu0 0
        %307 = vmatpush1.bf16.msra.mxu0 0
        %308 = vmatprep.subr.bf16.mxu0 0
        %309 = vmatpush1.bf16.msra.mxu0 0
        %310 = vmatprep.subr.bf16.mxu0 0
        %311 = vmatpush1.bf16.msra.mxu0 0
        %312 = vmatprep.subr.bf16.mxu0 0
        %313 = vmatpush1.bf16.msra.mxu0 0
        %314 = vmatprep.subr.bf16.mxu0 0
        %315 = vmatpush1.bf16.msra.mxu0 0
        %316 = vmatprep.subr.bf16.mxu0 0
        %317 = vmatpush1.bf16.msra.mxu0 0
        %318 = vmatprep.subr.bf16.mxu0 0
        %319 = vmatpush1.bf16.msra.mxu0 0
        %320 = vmatprep.subr.bf16.mxu0 0
        %321 = vmatpush1.bf16.msra.mxu0 0
        %322 = vmatprep.mubr.bf16.mxu0 0
        %323 = vmatmul.mubr.bf16.gmra.mrb[0].mxu0 %v284
        %v324 = vpop.f32.mrb[0].mxu0
        %v325 = vadd.f32 %v264, %v324
        %v326 = vpop.f32.mrb[0].mxu0
        %v327 = vpop.f32.mrb[0].mxu0
        %v328 = vadd.f32 %v267, %v327
        %v329 = vpop.f32.mrb[0].mxu0
        %330 = vdwg.mxu0
        %v331 = vld [vmem:[%s196 + $0x4] sm:$0xc]
        %v332 = vunpack.c.l.bf16 %v331
        %v333 = vld [vmem:[%s196 + $0x4] sm:$0x8]
        %v334 = vunpack.c.l.bf16 %v333
        %v335 = vunpack.c.l.bf16 %v200
        %v336 = vld [vmem:[%s196] sm:$0x6]
        %v337 = vunpack.c.l.bf16 %v336
        %v338 = vld [vmem:[%s196] sm:$0x8]
        %v339 = vunpack.c.l.bf16 %v338
        %v340 = vunpack.c.l.bf16 %v201
        %v343 = vrot.slane %v334, 3
        %v344 = vrot.slane %v335, 3
        %v345 = vsel %vm223, %v343, %v344
        %v347 = vmax.f32 %v332, %v345
        %v350 = vrot.slane %v339, 3
        %v351 = vrot.slane %v340, 3
        %v352 = vsel %vm223, %v350, %v351
        %v354 = vmax.f32 %v337, %v352
        %v356 = vrot.slane %v354, 7
        %357 = vrot.lane.b32.xlu0 %v356, 120
        %v358 = vpop.permute.xlu0 %357
        %v360 = vmax.f32 %v347, %v358
        %v362 = vrot.slane %v360, 7
        %v364 = vsel %vm223, %v328, %v362
        %vm365 = vcmask 523264
        %v366 = vsel %vm365, %v325, 0.0
        %367 = vadd.xlane.f32.xlu0 %v366
        %v368 = vpop.xlane.xlu0 %367
        %v369 = vsel %vm365, %v364, 0.0
        %370 = vadd.xlane.f32.xlu0 %v369
        %v371 = vpop.xlane.xlu0 %370
        %v372 = vmul.f32 %v325, %v325
        %v373 = vmul.f32 %v364, %v364
        %v374 = vsel %vm365, %v372, 0.0
        %375 = vadd.xlane.f32.xlu0 %v374
        %v376 = vpop.xlane.xlu0 %375
        %v377 = vsel %vm365, %v373, 0.0
        %378 = vadd.xlane.f32.xlu0 %v377
        %v379 = vpop.xlane.xlu0 %378
        %380 = vst [vmem:[%s187] sm:$0xff] %v368
        %381 = vst [vmem:[%s187 + $0x8] sm:$0xff] %v376
        %382 = vst [vmem:[%s187 + $0x10] sm:$0xff] %v371
        %383 = vst [vmem:[%s187 + $0x18] sm:$0xff] %v379
        %s384 = sand.u32 %s109, 1
        %s385 = scalar_lea.sflag [#allocation3], %s384
        %s386 = sand.u32 %s109, 1
        %s387 = smul.addr %s386, 32
        %s388 = scalar_lea.vmem [#allocation2], %s387
        // Predicated region
        $region33: #{tpu_custom_call.1} parent=31 // pred_check
          %p389 = pneg %p119
        $region34: #{tpu_custom_call.1} parent=31 // pred_check_branch
          %391 = sbr.rel (%p389) target = $region36
        $region35: #{tpu_custom_call.1} parent=31 // pred_region
          %s393 = ssub.s32 512, 512
          %394 = vsyncadd %s385, %s393
          %s395 = smul.addr %s22, 4
          %s396 = smul.addr %s21, 4
          %s397 = sadd.s32 %s395, %s396
          %s398 = smul.addr %s397, 128
          %s399 = scalar_lea.hbm %s3, %s398
          %s400 = sshll.u32 %s388, 4
          %s401 = int_to_ptr.vmem [resolvable:$true] %s400
          %406 = dma.vmem_to_hbm [thread:$0]  %s401, 512, %s399, %s385, 256, 256, 16
        $region36: #{tpu_custom_call.1} parent=31 // pred_fallthru
          _
      $region32: #{tpu_custom_call.1} parent=5 // pred_fallthru
        _
      %p407 = scmp.le.s32.totalorder 2, %s12
      // Predicated region
      $region37: #{tpu_custom_call.1} parent=5 // pred_check
        %p408 = pneg %p407
      $region38: #{tpu_custom_call.1} parent=5 // pred_check_branch
        %410 = sbr.rel (%p408) target = $region40
      $region39: #{tpu_custom_call.1} parent=5 // pred_region
        %s411 = ssub.s32 %s12, 2
        // Predicated region
        $region41: #{tpu_custom_call.1} parent=39 // pred_check
          %p412 = pneg %p125
        $region42: #{tpu_custom_call.1} parent=39 // pred_check_branch
          %414 = sbr.rel (%p412) target = $region44
        $region43: #{tpu_custom_call.1} parent=39 // pred_region
          %s415 = sand.u32 %s110, 1
          %s416 = scalar_lea.sflag [#allocation3], %s415
          %s417 = sand.u32 %s110, 1
          %s418 = smul.addr %s417, 32
          %s419 = scalar_lea.vmem [#allocation2], %s418
          %420 = dma.done %s416, 512
        $region44: #{tpu_custom_call.1} parent=39 // pred_fallthru
          _
      $region40: #{tpu_custom_call.1} parent=5 // pred_fallthru
        _
    $region6: #{tpu_custom_call.1} parent=1 // loop_footer
      %s16 = sadd.s32 1, %s12
    $region7: #{tpu_custom_call.1} parent=1 // loop_footer_branch
      %11 = sbr.rel target = $region3
    $region8: #{tpu_custom_call.1} parent=1 // loop_exit
      _
    %421 = vsyncpa [#allocation3], 1
    %s422 = scalar_lea.sflag [#allocation3], 1
    %423 = vsyncpa %s422, 1

</llo_original>
